<compile_context>
chip_gen: v5e
topology: v5e:2x2
jax: 0.10.0
libtpu: 0.0.40
codegen_flags: <defaults>
</compile_context>

<pallas_src>
import functools

import jax
import jax.numpy as jnp
from jax.experimental import pallas as pl
from jax.experimental.pallas import tpu as pltpu

_NEG_INF = -1e30   # finite: all-masked rows -> uniform probs (no NaN), doc'd for callers


def _round_up(x, m):
    return ((x + m - 1) // m) * m


def _pad_to(x, shape):
    # TODO(synk): for mem-bound callers with unaligned S/H, mask the tail in-kernel
    # (full-array-dim blocks) instead of materializing a padded HBM copy here.
    pads = [(0, t - s) for s, t in zip(x.shape, shape)]
    if not any(hi for _, hi in pads):
        return x
    return jnp.pad(x, pads)


def _tpu_generation():
    """Returns (vmem_capacity_bytes, bf16_vector_ok)."""
    kind = ''
    try:
        kind = jax.devices()[0].device_kind.lower()
    except Exception:
        pass
    vmem = None
    try:
        vmem = int(getattr(pltpu.get_tpu_info(), 'vmem_capacity_bytes', 0)) or None
    except Exception:
        vmem = None
    if vmem is None:
        vmem = (64 << 20) if ('v7' in kind or '7x' in kind) else (128 << 20)
    # v5e and older have no bf16 VPU/EUP -> keep f32 compute there.
    bf16_ok = not any(tag in kind for tag in ('v2', 'v3', 'v4', 'v5'))
    return vmem, bf16_ok


# ---------------------------------------------------------------------------
# Kernel bodies
# ---------------------------------------------------------------------------
def _seq_lens(tl_ref, block_b):
    """(bb,1,1) int32 row lengths from the SMEM prefetch ref (bb scalar reads)."""
    base = pl.program_id(0) * block_b
    rid = jax.lax.broadcasted_iota(jnp.int32, (block_b, 1, 1), 0)
    lens = jnp.zeros((block_b, 1, 1), jnp.int32)
    for bi in range(block_b):                      # tiny (bb,1,1) selects only
        lens = jnp.where(rid == bi, tl_ref[base + bi], lens)
    return lens


def _mask_softmax_context(tl_ref, scores, mem, ctx_ref, prob_ref, block_b):
    """scores: (bb,Tq,S) f32; mem: (bb,S,H). One broadcast mask, softmax, context."""
    bb, tq, s = scores.shape
    lens = _seq_lens(tl_ref, block_b)                               # (bb,1,1)
    pos = jax.lax.broadcasted_iota(jnp.int32, (bb, tq, s), 2)
    scores = jnp.where(pos < lens, scores, jnp.float32(_NEG_INF))   # single select
    mx = jnp.max(scores, axis=-1, keepdims=True)
    ex = jnp.exp(scores - mx)
    denom = jnp.sum(ex, axis=-1, keepdims=True)
    probs = ex / denom                 # exact divide: rows sum to 1 (EUP, ~free)
    ctx = jnp.einsum('bqs,bsd->bqd', probs.astype(mem.dtype), mem,
                     preferred_element_type=jnp.float32)
    prob_ref[...] = probs.astype(prob_ref.dtype)
    ctx_ref[...] = ctx.astype(ctx_ref.dtype)


def _dot_attn_kernel(tl_ref, q_ref, m_ref, ctx_ref, prob_ref, *, block_b):
    # Handles 'dot_prod' and (projection hoisted to the wrapper) 'general'.
    mem = m_ref[...]                       # (bb, S, H) native dtype, no upcast
    scores = jnp.einsum('bqd,bsd->bqs', q_ref[...], mem,
                        preferred_element_type=jnp.float32)
    _mask_softmax_context(tl_ref, scores, mem, ctx_ref, prob_ref, block_b)


def _concat_attn_kernel(tl_ref, qp_ref, m_ref, wm_ref, v_ref,
                        ctx_ref, prob_ref, sc_ref,
                        *, block_b, s_blk, compute_dtype):
    # qp = query @ Wq^T + b (hoisted to wrapper, tiny); mp = memory @ Wm^T is
    # computed HERE per s_blk chunk on the otherwise-idle MXU (saves one full
    # (B, S, H) HBM stream and a double-buffered VMEM block vs v2).
    bb, tq, _ = qp_ref.shape
    sp = sc_ref.shape[-1]
    n_chunks = sp // s_blk
    qp_all = qp_ref[...].astype(compute_dtype)       # (bb, Tq, Hp), ~1 vreg
    v_c = v_ref[...].astype(compute_dtype)           # (1, Hp)

    def chunk(c, carry):
        off = c * s_blk
        if not isinstance(off, int):
            off = pl.multiple_of(off, s_blk)
        for bi in range(bb):                                   # bb static & small
            mem_c = m_ref[bi, pl.ds(off, s_blk), :]            # (s_blk, Hp)
            mp_c = jnp.dot(mem_c, wm_ref[...],                 # MXU: m @ Wm^T
                           preferred_element_type=jnp.float32).astype(compute_dtype)
            rows = []
            for t in range(tq):                                # Tq static & small
                # live tanh tile is (1, s_blk, Hp): <=16 vregs f32 / 8 bf16 -> no spill
                h = jnp.tanh(qp_all[bi:bi + 1, t:t + 1, :] + mp_c[None, :, :])
                rows.append(jnp.sum((h * v_c[:, None, :]).astype(jnp.float32),
                                    axis=-1))                  # (1, s_blk), f32 acc
            sc_ref[bi, :, pl.ds(off, s_blk)] = jnp.concatenate(rows, axis=0)
        return carry

    if n_chunks == 1:
        chunk(0, 0)
    else:
        jax.lax.fori_loop(0, n_chunks, chunk, 0)

    _mask_softmax_context(tl_ref, sc_ref[...], m_ref[...], ctx_ref, prob_ref, block_b)


# ---------------------------------------------------------------------------
# Wrapper
# ---------------------------------------------------------------------------
def attention_layer_forward(query, memory_bank, true_len, params, mode,
                            probs_dtype=jnp.float32):
    """Pallas port of AttentionLayer.forward -> (context, scores_normalized)."""
    B, Tq, H = query.shape
    S = memory_bank.shape[1]
    vmem_cap, bf16_ok = _tpu_generation()
    ctx_dtype = memory_bank.dtype

    # ---- hoist constant-weight query projections out of the kernel ----------
    if mode == 'dot_prod':
        q_eff = query
    elif mode == 'general':
        # nn.Linear(H, H, bias=False); cast back to the input dtype so the kernel
        # streams half-width data when inputs are bf16 (mem-bound workload).
        q_eff = jnp.einsum('btd,hd->bth', query, params['general_w'],
                           preferred_element_type=jnp.float32).astype(query.dtype)
    elif mode == 'concat':
        wc = params['content_w']                              # (H, 2H) = [Wq | Wm]
        qp = (jnp.einsum('btd,hd->bth', query, wc[:, :H],
                         preferred_element_type=jnp.float32)
              + params['content_b']).astype(jnp.float32)      # tiny, keep f32
        wm_t = wc[:, H:].T.astype(memory_bank.dtype)          # (H, H): mp = m @ wm_t
    else:
        raise ValueError(f'mode out of bound: {mode}')

    # ---- lane/sublane-dense padded geometry ----------------------------------
    Tq_p = _round_up(Tq, 8)
    S_p = _round_up(S, 128)
    H_p = _round_up(H, 128)

    m_isz = jnp.dtype(memory_bank.dtype).itemsize
    p_isz = jnp.dtype(probs_dtype).itemsize
    c_isz = jnp.dtype(ctx_dtype).itemsize

    # Generation-aware block budget (double-buffered in/out blocks + scratch).
    blk_budget = (28 << 20) if vmem_cap <= (64 << 20) else (64 << 20)
    if mode in ('dot_prod', 'general'):
        in_per_b = Tq_p * H_p * jnp.dtype(q_eff.dtype).itemsize + S_p * H_p * m_isz
        scratch_per_b = 0
        fixed = 0
        unroll_cap = 32
    else:
        in_per_b = Tq_p * H_p * 4 + S_p * H_p * m_isz
        scratch_per_b = Tq_p * S_p * 4
        fixed = H_p * H_p * m_isz + H_p * 4                  # Wm + score vector
        unroll_cap = 8
    out_per_b = Tq_p * H_p * c_isz + Tq_p * S_p * p_isz
    per_b_eff = 2 * (in_per_b + out_per_b) + scratch_per_b
    bb = min(B, unroll_cap, max(1, (blk_budget - 2 * fixed) // per_b_eff))
    if B >= 2:                 # keep >= 2 grid steps so both v7x TCs get work
        bb = min(bb, pl.cdiv(B, 2))
    bb = max(1, bb)
    B_p = pl.cdiv(B, bb) * bb
    grid = (B_p // bb,)
    # TODO(synk): for B == 1 (single grid step) add an S-split grid axis with a
    # flash-style online softmax so the second v7x TensorCore is not idle.

    true_len_p = _pad_to(true_len.astype(jnp.int32), (B_p,))
    mem_p = _pad_to(memory_bank, (B_p, S_p, H_p))

    qspec = pl.BlockSpec((bb, Tq_p, H_p), lambda g, tl: (g, 0, 0))
    mspec = pl.BlockSpec((bb, S_p, H_p), lambda g, tl: (g, 0, 0))
    out_specs = (pl.BlockSpec((bb, Tq_p, H_p), lambda g, tl: (g, 0, 0)),
                 pl.BlockSpec((bb, Tq_p, S_p), lambda g, tl: (g, 0, 0)))
    out_shape = (jax.ShapeDtypeStruct((B_p, Tq_p, H_p), ctx_dtype),     # context
                 jax.ShapeDtypeStruct((B_p, Tq_p, S_p), probs_dtype))   # probs

    scratch_shapes = []
    if mode in ('dot_prod', 'general'):
        kernel = functools.partial(_dot_attn_kernel, block_b=bb)
        in_specs = [qspec, mspec]
        inputs = (_pad_to(q_eff, (B_p, Tq_p, H_p)), mem_p)
        flops = 4 * B_p * Tq_p * S_p * H_p
        trans = B_p * Tq_p * S_p
    else:  # concat
        s_blk = 128                               # lane-dense S tile of the tanh path
        compute_dtype = jnp.bfloat16 if bf16_ok else jnp.float32   # bf16 EUP on v6e/v7x
        kernel = functools.partial(_concat_attn_kernel, block_b=bb,
                                   s_blk=s_blk, compute_dtype=compute_dtype)
        wmspec = pl.BlockSpec((H_p, H_p), lambda g, tl: (0, 0))
        vspec = pl.BlockSpec((1, H_p), lambda g, tl: (0, 0))
        in_specs = [qspec, mspec, wmspec, vspec]
        inputs = (_pad_to(qp, (B_p, Tq_p, H_p)), mem_p,
                  _pad_to(wm_t, (H_p, H_p)),
                  _pad_to(params['score_w'].astype(jnp.float32), (1, H_p)))
        scratch_shapes = [pltpu.VMEM((bb, Tq_p, S_p), jnp.float32)]
        flops = (2 * B_p * S_p * H_p * H_p            # in-kernel Wm projection (MXU)
                 + 3 * B_p * Tq_p * S_p * H_p         # tanh-arg add + score reduce
                 + 2 * B_p * Tq_p * S_p * H_p)        # context matmul
        trans = B_p * Tq_p * S_p * (H_p + 1)          # tanh + exp

    in_bytes = sum(int(x.size) * x.dtype.itemsize for x in inputs)
    out_bytes = B_p * Tq_p * (H_p * c_isz + S_p * p_isz)
    cost = pl.CostEstimate(flops=int(flops), transcendentals=int(trans),
                           bytes_accessed=int(in_bytes + out_bytes))

    # Double-buffered blocks + scratch + 25% headroom, capped at 3/4 of physical
    # VMEM (leaves room for compiler-internal scratch, esp. on v7x's 64 MiB).
    vmem_need = 2 * fixed + bb * per_b_eff
    vmem_limit = int(min(3 * vmem_cap // 4,
                         max(32 << 20, vmem_need + vmem_need // 4 + (1 << 20))))

    grid_spec = pltpu.PrefetchScalarGridSpec(
        num_scalar_prefetch=1, grid=grid,
        in_specs=in_specs, out_specs=out_specs,
        scratch_shapes=scratch_shapes)

    ctx_p, probs_p = pl.pallas_call(
        kernel,
        out_shape=out_shape,
        grid_spec=grid_spec,
        compiler_params=pltpu.CompilerParams(
            dimension_semantics=("parallel",),
            vmem_limit_bytes=vmem_limit),
        cost_estimate=cost,
    )(true_len_p, *inputs)

    return ctx_p[:B, :Tq, :H], probs_p[:B, :Tq, :S]


# ---------------------------------------------------------------------------
# Pure-JAX reference (mirrors the PyTorch forward) for verification
# ---------------------------------------------------------------------------
def reference(query, memory_bank, true_len, params, mode):
    B, Tq, H = query.shape
    S = memory_bank.shape[1]
    if mode == 'dot_prod':
        scores = jnp.einsum('btd,bsd->bts', query, memory_bank)
    elif mode == 'general':
        temp = query @ params['general_w'].T
        scores = jnp.einsum('btd,bsd->bts', temp, memory_bank)
    elif mode == 'concat':
        qe = jnp.broadcast_to(query[:, :, None, :], (B, Tq, S, H))
        me = jnp.broadcast_to(memory_bank[:, None, :, :], (B, Tq, S, H))
        cat = jnp.concatenate([qe, me], axis=-1)
        c = jnp.tanh(cat @ params['content_w'].T + params['content_b'])
        scores = (c @ params['score_w'].T)[..., 0]
    mask = (jnp.arange(S)[None, :] < true_len[:, None])[:, None, :]
    scores = jnp.where(mask, scores, -jnp.inf)
    probs = jax.nn.softmax(scores, axis=-1)
    ctx = jnp.einsum('bts,bsd->btd', probs, memory_bank)
    return ctx, probs


# ---------------------------------------------------------------------------
if __name__ == "__main__":
    key = jax.random.PRNGKey(0)
    B, Tq, S, H = 4, 8, 8, 32
    k1, k2, k3, k4, k5, k6 = jax.random.split(key, 6)

    query = jax.random.normal(k1, (B, Tq, H), jnp.float32)
    memory = jax.random.normal(k2, (B, S, H), jnp.float32)
    # PyTorch sequence_mask broadcasting implies max(true_len) == S.
    true_len = jnp.array([S, 5, 3, S], dtype=jnp.int32)

    # Deterministic synthetic parameters (shapes from __init__)
    params = {
        'general_w': 0.1 * jax.random.normal(k3, (H, H), jnp.float32),        # general_linear.weight
        'content_w': 0.1 * jax.random.normal(k4, (H, 2 * H), jnp.float32),    # content_linear.weight
        'content_b': 0.1 * jax.random.normal(k5, (H,), jnp.float32),          # content_linear.bias
        'score_w':   0.1 * jax.random.normal(k6, (1, H), jnp.float32),        # score_linear.weight
    }

    for mode in ('dot_prod', 'general', 'concat'):
        ctx, probs = attention_layer_forward(query, memory, true_len, params, mode)
        jax.block_until_ready((ctx, probs))
        rctx, rprobs = reference(query, memory, true_len, params, mode)
        # concat uses bf16 tanh on v6e/v7x -> slightly looser tolerance there
        tol = 1e-2 if mode == 'concat' else 5e-3
        assert jnp.allclose(probs, rprobs, atol=tol, rtol=tol), f"probs mismatch ({mode})"
        assert jnp.allclose(ctx, rctx, atol=tol, rtol=tol), f"context mismatch ({mode})"

    print("KERNEL_OK")
</pallas_src>

<mosaic_0001>
module attributes {stable_mosaic.version = 11 : i64} {
  func.func @_dot_attn_kernel(%arg0: i32, %arg1: memref<4xi32, #tpu.memory_space<smem>>, %arg2: memref<2x8x128xf32, #tpu.memory_space<vmem>>, %arg3: memref<2x128x128xf32, #tpu.memory_space<vmem>>, %arg4: memref<2x8x128xf32, #tpu.memory_space<vmem>>, %arg5: memref<2x8x128xf32, #tpu.memory_space<vmem>>) attributes {dimension_semantics = [#tpu.dimension_semantics<parallel>], iteration_bounds = array<i64: 2>, scalar_prefetch = 1 : i64, scratch_operands = 0 : i64, tpu.core_type = #tpu.core_type<tc>, window_params = [{transform_indices = @transform_0, window_bounds = array<i64: 2, 8, 128>}, {transform_indices = @transform_1, window_bounds = array<i64: 2, 128, 128>}, {transform_indices = @transform_2, window_bounds = array<i64: 2, 8, 128>}, {transform_indices = @transform_3, window_bounds = array<i64: 2, 8, 128>}]} {
    %c0 = arith.constant 0 : index
    %c0_0 = arith.constant 0 : index
    %c0_1 = arith.constant 0 : index
    %0 = vector.load %arg3[%c0, %c0_0, %c0_1] : memref<2x128x128xf32, #tpu.memory_space<vmem>>, vector<2x128x128xf32>
    %c0_2 = arith.constant 0 : index
    %c0_3 = arith.constant 0 : index
    %c0_4 = arith.constant 0 : index
    %1 = vector.load %arg2[%c0_2, %c0_3, %c0_4] : memref<2x8x128xf32, #tpu.memory_space<vmem>>, vector<2x8x128xf32>
    "tpu.trace_start"() <{level = 10 : i32, message = "bqd,bsd->bqs"}> : () -> ()
    %cst = arith.constant dense<0.000000e+00> : vector<2x8x128xf32>
    %2 = tpu.matmul %1, %0, %cst {dimension_numbers = #tpu.dot_dimension_numbers<[2], [2], [1], [1], [0, 0, 0, 1, 1, 1], [0], [0]>} : vector<2x8x128xf32>, vector<2x128x128xf32>, vector<2x8x128xf32> -> vector<2x8x128xf32>
    "tpu.trace_stop"() : () -> ()
    %c2_i32 = arith.constant 2 : i32
    %3 = arith.muli %arg0, %c2_i32 : i32
    %4 = tpu.iota {dimensions = array<i32: 0>} : vector<2x1x1xi32>
    %c0_i32 = arith.constant 0 : i32
    %5 = vector.broadcast %c0_i32 : i32 to vector<2x1x1xi32>
    %c0_i32_5 = arith.constant 0 : i32
    %6 = vector.broadcast %c0_i32_5 : i32 to vector<2x1x1xi32>
    %7 = arith.cmpi eq, %4, %6 : vector<2x1x1xi32>
    %c0_i32_6 = arith.constant 0 : i32
    %8 = arith.addi %3, %c0_i32_6 : i32
    %9 = arith.index_cast %8 : i32 to index
    %10 = memref.load %arg1[%9] : memref<4xi32, #tpu.memory_space<smem>>
    %11 = vector.broadcast %10 : i32 to vector<2x1x1xi32>
    %12 = arith.select %7, %11, %5 : vector<2x1x1xi1>, vector<2x1x1xi32>
    %c1_i32 = arith.constant 1 : i32
    %13 = vector.broadcast %c1_i32 : i32 to vector<2x1x1xi32>
    %14 = arith.cmpi eq, %4, %13 : vector<2x1x1xi32>
    %c1_i32_7 = arith.constant 1 : i32
    %15 = arith.addi %3, %c1_i32_7 : i32
    %16 = arith.index_cast %15 : i32 to index
    %17 = memref.load %arg1[%16] : memref<4xi32, #tpu.memory_space<smem>>
    %18 = vector.broadcast %17 : i32 to vector<2x1x1xi32>
    %19 = arith.select %14, %18, %12 : vector<2x1x1xi1>, vector<2x1x1xi32>
    %20 = tpu.iota {dimensions = array<i32: 2>} : vector<2x8x128xi32>
    %21 = vector.broadcast %19 : vector<2x1x1xi32> to vector<2x8x128xi32>
    %22 = arith.cmpi slt, %20, %21 : vector<2x8x128xi32>
    %cst_8 = arith.constant -1.000000e+30 : f32
    %23 = vector.broadcast %cst_8 : f32 to vector<2x8x128xf32>
    %24 = arith.select %22, %2, %23 : vector<2x8x128xi1>, vector<2x8x128xf32>
    %cst_9 = arith.constant dense<0xFF800000> : vector<2x8xf32>
    %25 = vector.multi_reduction <maximumf>, %24, %cst_9 [2] : vector<2x8x128xf32> to vector<2x8xf32>
    %26 = vector.shape_cast %25 : vector<2x8xf32> to vector<2x8x1xf32>
    %27 = vector.broadcast %26 : vector<2x8x1xf32> to vector<2x8x128xf32>
    %28 = arith.subf %24, %27 : vector<2x8x128xf32>
    %29 = math.exp %28 : vector<2x8x128xf32>
    %cst_10 = arith.constant dense<0.000000e+00> : vector<2x8xf32>
    %30 = vector.multi_reduction <add>, %29, %cst_10 [2] : vector<2x8x128xf32> to vector<2x8xf32>
    %31 = vector.shape_cast %30 : vector<2x8xf32> to vector<2x8x1xf32>
    %32 = vector.broadcast %31 : vector<2x8x1xf32> to vector<2x8x128xf32>
    %33 = arith.divf %29, %32 : vector<2x8x128xf32>
    "tpu.trace_start"() <{level = 10 : i32, message = "bqs,bsd->bqd"}> : () -> ()
    %cst_11 = arith.constant dense<0.000000e+00> : vector<2x8x128xf32>
    %34 = tpu.matmul %33, %0, %cst_11 {dimension_numbers = #tpu.dot_dimension_numbers<[2], [1], [1], [2], [0, 0, 0, 1, 1, 2], [0], [0]>} : vector<2x8x128xf32>, vector<2x128x128xf32>, vector<2x8x128xf32> -> vector<2x8x128xf32>
    "tpu.trace_stop"() : () -> ()
    %c0_12 = arith.constant 0 : index
    %c0_13 = arith.constant 0 : index
    %c0_14 = arith.constant 0 : index
    %35 = vector.load %arg5[%c0_12, %c0_13, %c0_14] : memref<2x8x128xf32, #tpu.memory_space<vmem>>, vector<2x8x128xf32>
    tpu.vector_store %arg5[%c0_12, %c0_13, %c0_14], %33 {strides = array<i32>} : memref<2x8x128xf32, #tpu.memory_space<vmem>>, vector<2x8x128xf32>,
    %c0_15 = arith.constant 0 : index
    %c0_16 = arith.constant 0 : index
    %c0_17 = arith.constant 0 : index
    %36 = vector.load %arg4[%c0_15, %c0_16, %c0_17] : memref<2x8x128xf32, #tpu.memory_space<vmem>>, vector<2x8x128xf32>
    tpu.vector_store %arg4[%c0_15, %c0_16, %c0_17], %34 {strides = array<i32>} : memref<2x8x128xf32, #tpu.memory_space<vmem>>, vector<2x8x128xf32>,
    return
  }
  func.func @transform_0(%arg0: i32, %arg1: memref<4xi32, #tpu.memory_space<smem>>) -> (i32, i32, i32) {
    %c0_i32 = arith.constant 0 : i32
    %c0_i32_0 = arith.constant 0 : i32
    %c0_i32_1 = arith.constant 0 : i32
    return %arg0, %c0_i32, %c0_i32_0 : i32, i32, i32
  }
  func.func @transform_1(%arg0: i32, %arg1: memref<4xi32, #tpu.memory_space<smem>>) -> (i32, i32, i32) {
    %c0_i32 = arith.constant 0 : i32
    %c0_i32_0 = arith.constant 0 : i32
    %c0_i32_1 = arith.constant 0 : i32
    return %arg0, %c0_i32, %c0_i32_0 : i32, i32, i32
  }
  func.func @transform_2(%arg0: i32, %arg1: memref<4xi32, #tpu.memory_space<smem>>) -> (i32, i32, i32) {
    %c0_i32 = arith.constant 0 : i32
    %c0_i32_0 = arith.constant 0 : i32
    %c0_i32_1 = arith.constant 0 : i32
    return %arg0, %c0_i32, %c0_i32_0 : i32, i32, i32
  }
  func.func @transform_3(%arg0: i32, %arg1: memref<4xi32, #tpu.memory_space<smem>>) -> (i32, i32, i32) {
    %c0_i32 = arith.constant 0 : i32
    %c0_i32_0 = arith.constant 0 : i32
    %c0_i32_1 = arith.constant 0 : i32
    return %arg0, %c0_i32, %c0_i32_0 : i32, i32, i32
  }
}

</mosaic_0001>

<llo_original>
// kernel: tpu_custom_call.1
$region0: #{tpu_custom_call.1}
  #allocation0 [shape = 'u32[]', space=smem, size = 0x4, offset = 0x4, fixed_abs, tag = 'smem constant byte address 0x4 - core index']
  #allocation1 [shape = 'u32[72,128]{1,0:T(1,128)}', space=vmem, size = 0x9000, scoped, tag = 'internal scratch']
  #allocation2 [shape = 's32[1]{0}', space=sflag, size = 0x4, scoped, tag = 'scoped memory for tpu_custom_call.1']
  #allocation3 [shape = 'u8[512]{0}', space=smem, size = 0x200, scoped, tag = 'prefetched SMEM operand 0']
  %s0 = inlined_call_operand.hbm [shape: s32[4], index: 0, kind: input, shape index: {}]
  %s1 = inlined_call_operand.hbm [shape: f32[4,8,128], index: 1, kind: input, shape index: {}]
  %s2 = inlined_call_operand.hbm [shape: f32[4,128,128], index: 2, kind: input, shape index: {}]
  %s3 = inlined_call_operand.hbm [shape: f32[4,8,128], index: 3, kind: output, shape index: {0}]
  %s4 = inlined_call_operand.hbm [shape: f32[4,8,128], index: 4, kind: output, shape index: {1}]
  %5 = xla_tuple %s3, %s4
  %s6 = sld [smem:[#allocation0]]
  $region57: #{tpu_custom_call.1} parent=0
    _
  %s8 = ssub.s32 1, %s6
  %s9 = scalar_select 0, %s8, %s6
  %s11 = sshll.u32 %s0, 4
  %s12 = int_to_ptr.hbm [resolvable:$true] %s11
  %14 = dma.hbm_to_smem %s12, 16, [#allocation3], [#allocation2]
  %16 = dma.done [#allocation2], 16
  %17 = sfence
  $region1: #{tpu_custom_call.1} parent=0
    #allocation4 [shape = 'u8[16384]{0}', space=vmem, size = 0x4000, scoped, tag = 'input window, operand 1']
    #allocation5 [shape = 's32[2]{0}', space=sflag, size = 0x8, scoped, tag = 'scoped memory for tpu_custom_call.1']
    #allocation6 [shape = 's32[2]{0}', space=sflag, size = 0x8, scoped, tag = 'scoped memory for tpu_custom_call.1']
    #allocation7 [shape = 'u8[262144]{0}', space=vmem, size = 0x40000, scoped, tag = 'input window, operand 2']
    #allocation8 [shape = 's32[2]{0}', space=sflag, size = 0x8, scoped, tag = 'scoped memory for tpu_custom_call.1']
    #allocation9 [shape = 'u8[16384]{0}', space=vmem, size = 0x4000, scoped, tag = 'output window, operand 0']
    #allocation10 [shape = 'u8[16384]{0}', space=vmem, size = 0x4000, scoped, tag = 'output window, operand 1']
    #allocation11 [shape = 's32[2]{0}', space=sflag, size = 0x8, scoped, tag = 'scoped memory for tpu_custom_call.1']
    %18 = vsyncpa [#allocation5], 0
    %s19 = scalar_lea.sflag [#allocation5], 1
    %20 = vsyncpa %s19, 0
    %21 = vsyncpa [#allocation8], 0
    %s22 = scalar_lea.sflag [#allocation8], 1
    %23 = vsyncpa %s22, 0
    %24 = vsyncpa [#allocation6], 0
    %s25 = scalar_lea.sflag [#allocation6], 1
    %26 = vsyncpa %s25, 0
    %27 = vsyncpa [#allocation11], 0
    %s28 = scalar_lea.sflag [#allocation11], 1
    %29 = vsyncpa %s28, 0
    loop: start=0, step=1, limit=4
    $region2: #{tpu_custom_call.1} parent=1 // loop_pre_header
      _
    $region3: #{tpu_custom_call.1} parent=1 // loop_header
      %s31 = sphi 0, %s35
      %p32 = scmp.ge.s32.totalorder %s31, 4
      %s41 = sphi 0, %s43
      %s44 = sphi 0, %s41
      %s45 = sphi 0, %s44
      %s61 = sphi 0, %s45
      %s67 = sphi 0, %s69
      %s70 = sphi 0, %s67
      %s71 = sphi 0, %s70
      %s87 = sphi 0, %s71
      %s93 = sphi 0, %s95
      %s96 = sphi 0, %s93
      %s97 = sphi 0, %s96
      %s113 = sphi 0, %s97
      %s119 = sphi 0, %s121
      %s122 = sphi 0, %s119
      %s123 = sphi 0, %s122
      %s139 = sphi 0, %s123
    $region4: #{tpu_custom_call.1} parent=1 // loop_header_branch
      %34 = sbr.rel (%p32) target = $region8
    $region5: #{tpu_custom_call.1} parent=1 // loop_body
      %s36 = ssub.s32 %s31, 1
      %s37 = ssub.s32 %s31, 2
      %s38 = sadd.s32 %s31, 1
      %s39 = ssub.s32 %s31, %s38
      %p40 = scmp.eq.s32.totalorder %s39, 0
      %s42 = sadd.s32 %s41, 1
      %s43 = scalar_select %p40, %s41, %s42
      %p46 = pneg %p40
      %p47 = scmp.eq.s32.totalorder %s31, 1
      %p48 = por %p46, %p47
      %p49 = scmp.ne.s32.totalorder %s41, %s44
      %p50 = scmp.eq.s32.totalorder %s31, 0
      %p51 = por %p49, %p50
      %p52 = scmp.ne.s32.totalorder %s41, %s44
      %p53 = scmp.eq.s32.totalorder %s36, 1
      %p54 = por %p52, %p53
      %p55 = scmp.ne.s32.totalorder %s44, %s45
      %p56 = scmp.eq.s32.totalorder %s36, 0
      %p57 = por %p55, %p56
      %p58 = scmp.ne.s32.totalorder %s44, %s45
      %p59 = scmp.eq.s32.totalorder %s37, 1
      %p60 = por %p58, %p59
      %p62 = scmp.ne.s32.totalorder %s45, %s61
      %p63 = scmp.eq.s32.totalorder %s37, 0
      %p64 = por %p62, %p63
      %s65 = ssub.s32 %s31, %s38
      %p66 = scmp.eq.s32.totalorder %s65, 0
      %s68 = sadd.s32 %s67, 1
      %s69 = scalar_select %p66, %s67, %s68
      %p72 = pneg %p66
      %p73 = scmp.eq.s32.totalorder %s31, 1
      %p74 = por %p72, %p73
      %p75 = scmp.ne.s32.totalorder %s67, %s70
      %p76 = scmp.eq.s32.totalorder %s31, 0
      %p77 = por %p75, %p76
      %p78 = scmp.ne.s32.totalorder %s67, %s70
      %p79 = scmp.eq.s32.totalorder %s36, 1
      %p80 = por %p78, %p79
      %p81 = scmp.ne.s32.totalorder %s70, %s71
      %p82 = scmp.eq.s32.totalorder %s36, 0
      %p83 = por %p81, %p82
      %p84 = scmp.ne.s32.totalorder %s70, %s71
      %p85 = scmp.eq.s32.totalorder %s37, 1
      %p86 = por %p84, %p85
      %p88 = scmp.ne.s32.totalorder %s71, %s87
      %p89 = scmp.eq.s32.totalorder %s37, 0
      %p90 = por %p88, %p89
      %s91 = ssub.s32 %s31, %s38
      %p92 = scmp.eq.s32.totalorder %s91, 0
      %s94 = sadd.s32 %s93, 1
      %s95 = scalar_select %p92, %s93, %s94
      %p98 = pneg %p92
      %p99 = scmp.eq.s32.totalorder %s31, 1
      %p100 = por %p98, %p99
      %p101 = scmp.ne.s32.totalorder %s93, %s96
      %p102 = scmp.eq.s32.totalorder %s31, 0
      %p103 = por %p101, %p102
      %p104 = scmp.ne.s32.totalorder %s93, %s96
      %p105 = scmp.eq.s32.totalorder %s36, 1
      %p106 = por %p104, %p105
      %p107 = scmp.ne.s32.totalorder %s96, %s97
      %p108 = scmp.eq.s32.totalorder %s36, 0
      %p109 = por %p107, %p108
      %p110 = scmp.ne.s32.totalorder %s96, %s97
      %p111 = scmp.eq.s32.totalorder %s37, 1
      %p112 = por %p110, %p111
      %p114 = scmp.ne.s32.totalorder %s97, %s113
      %p115 = scmp.eq.s32.totalorder %s37, 0
      %p116 = por %p114, %p115
      %s117 = ssub.s32 %s31, %s38
      %p118 = scmp.eq.s32.totalorder %s117, 0
      %s120 = sadd.s32 %s119, 1
      %s121 = scalar_select %p118, %s119, %s120
      %p124 = pneg %p118
      %p125 = scmp.eq.s32.totalorder %s31, 1
      %p126 = por %p124, %p125
      %p127 = scmp.ne.s32.totalorder %s119, %s122
      %p128 = scmp.eq.s32.totalorder %s31, 0
      %p129 = por %p127, %p128
      %p130 = scmp.ne.s32.totalorder %s119, %s122
      %p131 = scmp.eq.s32.totalorder %s36, 1
      %p132 = por %p130, %p131
      %p133 = scmp.ne.s32.totalorder %s122, %s123
      %p134 = scmp.eq.s32.totalorder %s36, 0
      %p135 = por %p133, %p134
      %p136 = scmp.ne.s32.totalorder %s122, %s123
      %p137 = scmp.eq.s32.totalorder %s37, 1
      %p138 = por %p136, %p137
      %p140 = scmp.ne.s32.totalorder %s123, %s139
      %p141 = scmp.eq.s32.totalorder %s37, 0
      %p142 = por %p140, %p141
      %p143 = scmp.le.s32.totalorder 1, %s31
      %p144 = scmp.lt.s32.totalorder %s31, 3
      %p145 = pnand %p143, %p144
      %p146 = pneg %p145
      // Predicated region
      $region9: #{tpu_custom_call.1} parent=5 // pred_check
        _
      $region10: #{tpu_custom_call.1} parent=5 // pred_check_branch
        %148 = sbr.rel (%p145) target = $region12
      $region11: #{tpu_custom_call.1} parent=5 // pred_region
        %s149 = ssub.s32 %s31, 1
      $region12: #{tpu_custom_call.1} parent=5 // pred_fallthru
        _
      %p150 = scmp.lt.s32.totalorder %s31, 2
      // Predicated region
      $region13: #{tpu_custom_call.1} parent=5 // pred_check
        %p151 = pneg %p150
      $region14: #{tpu_custom_call.1} parent=5 // pred_check_branch
        %153 = sbr.rel (%p151) target = $region16
      $region15: #{tpu_custom_call.1} parent=5 // pred_region
        // Predicated region
        $region17: #{tpu_custom_call.1} parent=15 // pred_check
          %p154 = pneg %p51
        $region18: #{tpu_custom_call.1} parent=15 // pred_check_branch
          %156 = sbr.rel (%p154) target = $region20
        $region19: #{tpu_custom_call.1} parent=15 // pred_region
          %s157 = sand.u32 %s41, 1
          %s158 = scalar_lea.sflag [#allocation5], %s157
          %s159 = sand.u32 %s41, 1
          %s160 = smul.addr %s159, 16
          %s161 = scalar_lea.vmem [#allocation4], %s160
          %s162 = smul.u32 2, %s31
          %164 = vsyncadd %s158, 0
          %s165 = smul.addr %s162, 8
          %s166 = scalar_lea.hbm %s1, %s165
          %s167 = sshll.u32 %s166, 4
          %s168 = int_to_ptr.hbm [resolvable:$true] %s167
          %s169 = sshll.u32 %s161, 4
          %s170 = int_to_ptr.vmem [resolvable:$true] %s169
          %175 = dma.hbm_to_vmem [thread:$0]  %s168, 256, %s170, %s158, 128, 128, 8
        $region20: #{tpu_custom_call.1} parent=15 // pred_fallthru
          _
        // Predicated region
        $region21: #{tpu_custom_call.1} parent=15 // pred_check
          %p176 = pneg %p77
        $region22: #{tpu_custom_call.1} parent=15 // pred_check_branch
          %178 = sbr.rel (%p176) target = $region24
        $region23: #{tpu_custom_call.1} parent=15 // pred_region
          %s179 = sand.u32 %s67, 1
          %s180 = scalar_lea.sflag [#allocation8], %s179
          %s181 = sand.u32 %s67, 1
          %s182 = smul.addr %s181, 256
          %s183 = scalar_lea.vmem [#allocation7], %s182
          %s184 = smul.u32 2, %s31
          %186 = vsyncadd %s180, 0
          %s187 = smul.addr %s184, 16
          %s188 = smul.addr %s187, 8
          %s189 = scalar_lea.hbm %s2, %s188
          %s190 = sshll.u32 %s189, 4
          %s191 = int_to_ptr.hbm [resolvable:$true] %s190
          %s192 = sshll.u32 %s183, 4
          %s193 = int_to_ptr.vmem [resolvable:$true] %s192
          %198 = dma.hbm_to_vmem [thread:$0]  %s191, 4096, %s193, %s180, 128, 128, 8
        $region24: #{tpu_custom_call.1} parent=15 // pred_fallthru
          _
      $region16: #{tpu_custom_call.1} parent=5 // pred_fallthru
        _
      %p199 = scmp.le.s32.totalorder 1, %s31
      %p200 = scmp.lt.s32.totalorder %s31, 3
      %p201 = pnand %p199, %p200
      %p202 = pneg %p201
      // Predicated region
      $region25: #{tpu_custom_call.1} parent=5 // pred_check
        _
      $region26: #{tpu_custom_call.1} parent=5 // pred_check_branch
        %204 = sbr.rel (%p201) target = $region28
      $region27: #{tpu_custom_call.1} parent=5 // pred_region
        %s205 = ssub.s32 %s31, 1
        %s206 = sand.u32 %s44, 1
        %s207 = scalar_lea.sflag [#allocation5], %s206
        %s208 = sand.u32 %s44, 1
        %s209 = smul.addr %s208, 16
        %s210 = scalar_lea.vmem [#allocation4], %s209
        // Predicated region
        $region29: #{tpu_custom_call.1} parent=27 // pred_check
          %p211 = pneg %p57
        $region30: #{tpu_custom_call.1} parent=27 // pred_check_branch
          %213 = sbr.rel (%p211) target = $region32
        $region31: #{tpu_custom_call.1} parent=27 // pred_region
          %215 = dma.done %s207, 256
        $region32: #{tpu_custom_call.1} parent=27 // pred_fallthru
          _
        %s216 = sand.u32 %s70, 1
        %s217 = scalar_lea.sflag [#allocation8], %s216
        %s218 = sand.u32 %s70, 1
        %s219 = smul.addr %s218, 256
        %s220 = scalar_lea.vmem [#allocation7], %s219
        // Predicated region
        $region33: #{tpu_custom_call.1} parent=27 // pred_check
          %p221 = pneg %p83
        $region34: #{tpu_custom_call.1} parent=27 // pred_check_branch
          %223 = sbr.rel (%p221) target = $region36
        $region35: #{tpu_custom_call.1} parent=27 // pred_region
          %225 = dma.done %s217, 4096
        $region36: #{tpu_custom_call.1} parent=27 // pred_fallthru
          _
        %s226 = sand.u32 %s44, 1
        %s227 = scalar_lea.sflag [#allocation5], %s226
        %s228 = sand.u32 %s44, 1
        %s229 = smul.addr %s228, 16
        %s230 = scalar_lea.vmem [#allocation4], %s229
        %p231 = pneg %p57
        %p232 = pneg %p54
        %s233 = sand.u32 %s70, 1
        %s234 = scalar_lea.sflag [#allocation8], %s233
        %s235 = sand.u32 %s70, 1
        %s236 = smul.addr %s235, 256
        %s237 = scalar_lea.vmem [#allocation7], %s236
        %p238 = pneg %p83
        %p239 = pneg %p80
        %p240 = pneg %p109
        %p241 = pneg %p106
        %s242 = sand.u32 %s96, 1
        %s243 = scalar_lea.sflag [#allocation6], %s242
        %s244 = sand.u32 %s96, 1
        %s245 = smul.addr %s244, 16
        %s246 = scalar_lea.vmem [#allocation9], %s245
        %p247 = pneg %p135
        %p248 = pneg %p132
        %s249 = sand.u32 %s122, 1
        %s250 = scalar_lea.sflag [#allocation11], %s249
        %s251 = sand.u32 %s122, 1
        %s252 = smul.addr %s251, 16
        %s253 = scalar_lea.vmem [#allocation10], %s252
        %s254 = smul.u32 2, %s36
        %s255 = smul.u32 2, %s36
        %s256 = smul.u32 2, %s36
        %s257 = smul.u32 2, %s36
        %v258 = vld [vmem:[%s220] sm:$0xff]
        %v259 = vld [vmem:[%s220 + $0x8] sm:$0xff]
        %v260 = vld [vmem:[%s220 + $0x10] sm:$0xff]
        %v261 = vld [vmem:[%s220 + $0x18] sm:$0xff]
        %v262 = vld [vmem:[%s220 + $0x20] sm:$0xff]
        %v263 = vld [vmem:[%s220 + $0x28] sm:$0xff]
        %v264 = vld [vmem:[%s220 + $0x30] sm:$0xff]
        %v265 = vld [vmem:[%s220 + $0x38] sm:$0xff]
        %v266 = vld [vmem:[%s220 + $0x40] sm:$0xff]
        %v267 = vld [vmem:[%s220 + $0x48] sm:$0xff]
        %v268 = vld [vmem:[%s220 + $0x50] sm:$0xff]
        %v269 = vld [vmem:[%s220 + $0x58] sm:$0xff]
        %v270 = vld [vmem:[%s220 + $0x60] sm:$0xff]
        %v271 = vld [vmem:[%s220 + $0x68] sm:$0xff]
        %v272 = vld [vmem:[%s220 + $0x70] sm:$0xff]
        %v273 = vld [vmem:[%s220 + $0x78] sm:$0xff]
        %v274 = vld [vmem:[%s220 + $0x80] sm:$0xff]
        %v275 = vld [vmem:[%s220 + $0x88] sm:$0xff]
        %v276 = vld [vmem:[%s220 + $0x90] sm:$0xff]
        %v277 = vld [vmem:[%s220 + $0x98] sm:$0xff]
        %v278 = vld [vmem:[%s220 + $0xa0] sm:$0xff]
        %v279 = vld [vmem:[%s220 + $0xa8] sm:$0xff]
        %v280 = vld [vmem:[%s220 + $0xb0] sm:$0xff]
        %v281 = vld [vmem:[%s220 + $0xb8] sm:$0xff]
        %v282 = vld [vmem:[%s220 + $0xc0] sm:$0xff]
        %v283 = vld [vmem:[%s220 + $0xc8] sm:$0xff]
        %v284 = vld [vmem:[%s220 + $0xd0] sm:$0xff]
        %v285 = vld [vmem:[%s220 + $0xd8] sm:$0xff]
        %v286 = vld [vmem:[%s220 + $0xe0] sm:$0xff]
        %v287 = vld [vmem:[%s220 + $0xe8] sm:$0xff]
        %v288 = vld [vmem:[%s220 + $0xf0] sm:$0xff]
        %v289 = vld [vmem:[%s220 + $0xf8] sm:$0xff]
        %v290 = vld [vmem:[%s210] sm:$0xff]
        %v291 = vld [vmem:[%s210 + $0x8] sm:$0xff]
        %292 = vmatpush.xpose.msra.mxu0 %v273
        %293 = vmatpush.xpose.msra.mxu0 %v272
        %294 = vmatpush.xpose.msra.mxu0 %v271
        %295 = vmatpush.xpose.msra.mxu0 %v270
        %296 = vmatpush.xpose.msra.mxu0 %v269
        %297 = vmatpush.xpose.msra.mxu0 %v268
        %298 = vmatpush.xpose.msra.mxu0 %v267
        %299 = vmatpush.xpose.msra.mxu0 %v266
        %300 = vmatpush.xpose.msra.mxu0 %v265
        %301 = vmatpush.xpose.msra.mxu0 %v264
        %302 = vmatpush.xpose.msra.mxu0 %v263
        %303 = vmatpush.xpose.msra.mxu0 %v262
        %304 = vmatpush.xpose.msra.mxu0 %v261
        %305 = vmatpush.xpose.msra.mxu0 %v260
        %306 = vmatpush.xpose.msra.mxu0 %v259
        %307 = vmatpush.xpose.msra.mxu0 %v258
        %308 = vmatmul.f32.gmra.mxu0 %v290
        %v309 = vpop.f32.mrf.mxu0
        %v310 = vadd.f32 0.0, %v309
        %311 = vdwg.mxu0
        %312 = vmatpush.xpose.msra.mxu0 %v289
        %313 = vmatpush.xpose.msra.mxu0 %v288
        %314 = vmatpush.xpose.msra.mxu0 %v287
        %315 = vmatpush.xpose.msra.mxu0 %v286
        %316 = vmatpush.xpose.msra.mxu0 %v285
        %317 = vmatpush.xpose.msra.mxu0 %v284
        %318 = vmatpush.xpose.msra.mxu0 %v283
        %319 = vmatpush.xpose.msra.mxu0 %v282
        %320 = vmatpush.xpose.msra.mxu0 %v281
        %321 = vmatpush.xpose.msra.mxu0 %v280
        %322 = vmatpush.xpose.msra.mxu0 %v279
        %323 = vmatpush.xpose.msra.mxu0 %v278
        %324 = vmatpush.xpose.msra.mxu0 %v277
        %325 = vmatpush.xpose.msra.mxu0 %v276
        %326 = vmatpush.xpose.msra.mxu0 %v275
        %327 = vmatpush.xpose.msra.mxu0 %v274
        %328 = vmatmul.f32.gmra.mxu0 %v291
        %v329 = vpop.f32.mrf.mxu0
        %v330 = vadd.f32 0.0, %v329
        %331 = vdwg.mxu0
        %s332 = smul.u32 %s36, 2
        %s333 = sld [smem:[#allocation3 + %s332]]
        %v334 = vstv %s333
        %s335 = sadd.s32 %s332, 1
        %s336 = sld [smem:[#allocation3 + %s335]]
        %v337 = vstv %s336
        %v338 = vlaneseq
        %v339 = vand.u32 %v338, 127
        %vm340 = vcmp.lt.s32.totalorder %v339, %v334
        %vm341 = vcmp.lt.s32.totalorder %v339, %v337
        %v342 = vsel %vm340, %v310, -1e+30
        %v343 = vsel %vm341, %v330, -1e+30
        %344 = vmax.xlane.f32.xlu0 %v342
        %v345 = vpop.xlane.xlu0 %344
        %346 = vmax.xlane.f32.xlu0 %v343
        %v347 = vpop.xlane.xlu0 %346
        %v348 = vsub.f32 %v342, %v345
        %v349 = vsub.f32 %v343, %v347
        %v350 = vmul.f32 %v348, 1.442695
        %v351 = vpow.pop %v350
        %v352 = vmul.f32 %v349, 1.442695
        %v353 = vpow.pop %v352
        %354 = vadd.xlane.f32.xlu0 %v351
        %v355 = vpop.xlane.xlu0 %354
        %356 = vadd.xlane.f32.xlu0 %v353
        %v357 = vpop.xlane.xlu0 %356
        %v358 = vrcp.pop %v355
        %v359 = vmul.f32 %v355, %v358
        %v360 = vsub.f32 1.0, %v359
        %v361 = vmul.f32 %v358, %v360
        %v362 = vadd.f32 %v358, %v361
        %vm363 = vweird.f32 %v355
        %vm364 = vweird.f32 %v358
        %vm365 = vmor %vm363, %vm364
        %v366 = vsel %vm365, %v358, %v362
        %v367 = vand.u32 2147483647, %v355
        %vm368 = vcmp.eq.f32.partialorder %v367, 8.507059e+37
        %v369 = vand.u32 %v355, 2147483648
        %v370 = vor.u32 1.1754944e-38, %v369
        %v371 = vsel %vm368, %v370, %v366
        %v372 = vmul.f32 %v351, %v371
        %v373 = vrcp.pop %v357
        %v374 = vmul.f32 %v357, %v373
        %v375 = vsub.f32 1.0, %v374
        %v376 = vmul.f32 %v373, %v375
        %v377 = vadd.f32 %v373, %v376
        %vm378 = vweird.f32 %v357
        %vm379 = vweird.f32 %v373
        %vm380 = vmor %vm378, %vm379
        %v381 = vsel %vm380, %v373, %v377
        %v382 = vand.u32 2147483647, %v357
        %vm383 = vcmp.eq.f32.partialorder %v382, 8.507059e+37
        %v384 = vand.u32 %v357, 2147483648
        %v385 = vor.u32 1.1754944e-38, %v384
        %v386 = vsel %vm383, %v385, %v381
        %v387 = vmul.f32 %v353, %v386
        %388 = vmatpush.msra.mxu0 %v273
        %389 = vmatpush.msra.mxu0 %v272
        %390 = vmatpush.msra.mxu0 %v271
        %391 = vmatpush.msra.mxu0 %v270
        %392 = vmatpush.msra.mxu0 %v269
        %393 = vmatpush.msra.mxu0 %v268
        %394 = vmatpush.msra.mxu0 %v267
        %395 = vmatpush.msra.mxu0 %v266
        %396 = vmatpush.msra.mxu0 %v265
        %397 = vmatpush.msra.mxu0 %v264
        %398 = vmatpush.msra.mxu0 %v263
        %399 = vmatpush.msra.mxu0 %v262
        %400 = vmatpush.msra.mxu0 %v261
        %401 = vmatpush.msra.mxu0 %v260
        %402 = vmatpush.msra.mxu0 %v259
        %403 = vmatpush.msra.mxu0 %v258
        %404 = vmatmul.f32.gmra.mxu0 %v372
        %v405 = vpop.f32.mrf.mxu0
        %v406 = vadd.f32 0.0, %v405
        %407 = vdwg.mxu0
        %408 = vmatpush.msra.mxu0 %v289
        %409 = vmatpush.msra.mxu0 %v288
        %410 = vmatpush.msra.mxu0 %v287
        %411 = vmatpush.msra.mxu0 %v286
        %412 = vmatpush.msra.mxu0 %v285
        %413 = vmatpush.msra.mxu0 %v284
        %414 = vmatpush.msra.mxu0 %v283
        %415 = vmatpush.msra.mxu0 %v282
        %416 = vmatpush.msra.mxu0 %v281
        %417 = vmatpush.msra.mxu0 %v280
        %418 = vmatpush.msra.mxu0 %v279
        %419 = vmatpush.msra.mxu0 %v278
        %420 = vmatpush.msra.mxu0 %v277
        %421 = vmatpush.msra.mxu0 %v276
        %422 = vmatpush.msra.mxu0 %v275
        %423 = vmatpush.msra.mxu0 %v274
        %424 = vmatmul.f32.gmra.mxu0 %v387
        %v425 = vpop.f32.mrf.mxu0
        %v426 = vadd.f32 0.0, %v425
        %427 = vdwg.mxu0
        %428 = vst [vmem:[%s253] sm:$0xff] %v372
        %429 = vst [vmem:[%s253 + $0x8] sm:$0xff] %v387
        %430 = vst [vmem:[%s246] sm:$0xff] %v406
        %431 = vst [vmem:[%s246 + $0x8] sm:$0xff] %v426
        %s432 = sand.u32 %s96, 1
        %s433 = scalar_lea.sflag [#allocation6], %s432
        %s434 = sand.u32 %s96, 1
        %s435 = smul.addr %s434, 16
        %s436 = scalar_lea.vmem [#allocation9], %s435
        %s437 = sand.u32 %s122, 1
        %s438 = scalar_lea.sflag [#allocation11], %s437
        %s439 = sand.u32 %s122, 1
        %s440 = smul.addr %s439, 16
        %s441 = scalar_lea.vmem [#allocation10], %s440
        // Predicated region
        $region37: #{tpu_custom_call.1} parent=27 // pred_check
          %p442 = pneg %p106
        $region38: #{tpu_custom_call.1} parent=27 // pred_check_branch
          %444 = sbr.rel (%p442) target = $region40
        $region39: #{tpu_custom_call.1} parent=27 // pred_region
          %s445 = smul.u32 2, %s36
          %447 = vsyncadd %s433, 0
          %s448 = smul.addr %s445, 8
          %s449 = scalar_lea.hbm %s3, %s448
          %s450 = sshll.u32 %s436, 4
          %s451 = int_to_ptr.vmem [resolvable:$true] %s450
          %s452 = sshll.u32 %s449, 4
          %s453 = int_to_ptr.hbm [resolvable:$true] %s452
          %458 = dma.vmem_to_hbm [thread:$0]  %s451, 256, %s453, %s433, 128, 128, 8
        $region40: #{tpu_custom_call.1} parent=27 // pred_fallthru
          _
        // Predicated region
        $region41: #{tpu_custom_call.1} parent=27 // pred_check
          %p459 = pneg %p132
        $region42: #{tpu_custom_call.1} parent=27 // pred_check_branch
          %461 = sbr.rel (%p459) target = $region44
        $region43: #{tpu_custom_call.1} parent=27 // pred_region
          %s462 = smul.u32 2, %s36
          %464 = vsyncadd %s438, 0
          %s465 = smul.addr %s462, 8
          %s466 = scalar_lea.hbm %s4, %s465
          %s467 = sshll.u32 %s441, 4
          %s468 = int_to_ptr.vmem [resolvable:$true] %s467
          %s469 = sshll.u32 %s466, 4
          %s470 = int_to_ptr.hbm [resolvable:$true] %s469
          %475 = dma.vmem_to_hbm [thread:$0]  %s468, 256, %s470, %s438, 128, 128, 8
        $region44: #{tpu_custom_call.1} parent=27 // pred_fallthru
          _
      $region28: #{tpu_custom_call.1} parent=5 // pred_fallthru
        _
      %p476 = scmp.le.s32.totalorder 2, %s31
      // Predicated region
      $region45: #{tpu_custom_call.1} parent=5 // pred_check
        %p477 = pneg %p476
      $region46: #{tpu_custom_call.1} parent=5 // pred_check_branch
        %479 = sbr.rel (%p477) target = $region48
      $region47: #{tpu_custom_call.1} parent=5 // pred_region
        %s480 = ssub.s32 %s31, 2
        // Predicated region
        $region49: #{tpu_custom_call.1} parent=47 // pred_check
          %p481 = pneg %p112
        $region50: #{tpu_custom_call.1} parent=47 // pred_check_branch
          %483 = sbr.rel (%p481) target = $region52
        $region51: #{tpu_custom_call.1} parent=47 // pred_region
          %s484 = sand.u32 %s97, 1
          %s485 = scalar_lea.sflag [#allocation6], %s484
          %s486 = sand.u32 %s97, 1
          %s487 = smul.addr %s486, 16
          %s488 = scalar_lea.vmem [#allocation9], %s487
          %490 = dma.done %s485, 256
        $region52: #{tpu_custom_call.1} parent=47 // pred_fallthru
          _
        // Predicated region
        $region53: #{tpu_custom_call.1} parent=47 // pred_check
          %p491 = pneg %p138
        $region54: #{tpu_custom_call.1} parent=47 // pred_check_branch
          %493 = sbr.rel (%p491) target = $region56
        $region55: #{tpu_custom_call.1} parent=47 // pred_region
          %s494 = sand.u32 %s123, 1
          %s495 = scalar_lea.sflag [#allocation11], %s494
          %s496 = sand.u32 %s123, 1
          %s497 = smul.addr %s496, 16
          %s498 = scalar_lea.vmem [#allocation10], %s497
          %500 = dma.done %s495, 256
        $region56: #{tpu_custom_call.1} parent=47 // pred_fallthru
          _
      $region48: #{tpu_custom_call.1} parent=5 // pred_fallthru
        _
    $region6: #{tpu_custom_call.1} parent=1 // loop_footer
      %s35 = sadd.s32 1, %s31
    $region7: #{tpu_custom_call.1} parent=1 // loop_footer_branch
      %30 = sbr.rel target = $region3
    $region8: #{tpu_custom_call.1} parent=1 // loop_exit
      _
    %501 = vsyncpa [#allocation5], 1
    %s502 = scalar_lea.sflag [#allocation5], 1
    %503 = vsyncpa %s502, 1
    %504 = vsyncpa [#allocation8], 1
    %s505 = scalar_lea.sflag [#allocation8], 1
    %506 = vsyncpa %s505, 1
    %507 = vsyncpa [#allocation6], 1
    %s508 = scalar_lea.sflag [#allocation6], 1
    %509 = vsyncpa %s508, 1
    %510 = vsyncpa [#allocation11], 1
    %s511 = scalar_lea.sflag [#allocation11], 1
    %512 = vsyncpa %s511, 1

</llo_original>
